<compile_context>
chip_gen: v6e
topology: v6e:2x2x1
jax: 0.10.0
libtpu: 0.0.40
codegen_flags: <defaults>
</compile_context>

<pallas_src>
import functools

import jax
import jax.numpy as jnp
import numpy as np
from jax import lax
from jax.experimental import pallas as pl
from jax.experimental.pallas import tpu as pltpu

N_BINS = 15     # matches _ECELoss(n_bins=15): boundaries k/n_bins == torch.linspace(0,1,16)
LANES = 128     # bin axis padded to one full lane register


def _round_up(x, m):
    return (x + m - 1) // m * m


def _tpu_generation():
    """Coarse TPU generation detection for VMEM budgeting (safe fallback)."""
    try:
        kind = jax.devices()[0].device_kind.lower()
    except Exception:  # pragma: no cover - e.g. CPU tracing
        return "unknown"
    if "v7" in kind or "7x" in kind:
        return "v7x"
    if "v6" in kind:
        return "v6e"
    if "v5" in kind:
        return "v5e"
    return "unknown"


# Scoped-VMEM limits per generation.  v5e/v6e have 128 MiB physical VMEM so the
# 16/32 MiB scoped defaults are needlessly conservative; v7x has only 64 MiB
# per TensorCore so we stay well inside it.
_VMEM_LIMIT_BYTES = {
    "v5e": 64 * 1024 * 1024,
    "v6e": 64 * 1024 * 1024,
    "v7x": 48 * 1024 * 1024,
    "unknown": 48 * 1024 * 1024,
}


def _auto_block_rows(C, itemsize, vmem_limit):
    """Largest 128-aligned batch tile whose full VMEM footprint fits the limit.

    Per-row footprint accounts for:
      * 2x native-dtype logits block (double-buffered pipeline input), with the
        class axis lane-padded to a multiple of 128,
      * 2x labels block: a (block_rows, 1) int32 block pads to 128 lanes,
      * ~3 f32 working copies of the tile (f32 cast, exp, argmax iota/select),
      * a few lane-wide f32 temps (in_bin etc.),
    plus the resident (8, 128) histogram block and ~4 MiB headroom.
    """
    c_pad = _round_up(C, LANES)
    per_row = (2 * c_pad * itemsize          # double-buffered logits input
               + 2 * LANES * 4               # double-buffered lane-padded labels
               + 3 * c_pad * 4               # f32 compute working copies
               + 3 * LANES * 4)              # lane-wide f32 temps
    hist_bytes = 2 * 8 * LANES * 4
    headroom = 4 * 1024 * 1024
    usable = max(vmem_limit - hist_bytes - headroom, 1 << 20)
    rows = usable // per_row
    return int(max(128, min(8192, (rows // 128) * 128)))


def _ece_hist_kernel(logits_ref, labels_ref, hist_ref, *, n_total, n_bins):
    """Accumulates an (8, LANES) histogram block:
       row 0: per-bin sample count, row 1: per-bin sum of confidences,
       row 2: per-bin sum of accuracies, rows 3..7 unused (zero)."""
    p = pl.program_id(0)          # core-parallel slice (megacore split on v7x)
    b = pl.program_id(1)          # batch tile within the slice (accumulation axis)

    @pl.when(b == 0)
    def _init():
        hist_ref[...] = jnp.zeros_like(hist_ref)

    logits = logits_ref[...].astype(jnp.float32)                   # (TB, C)
    labels = labels_ref[...]                                       # (TB, 1) int32
    tb, c = logits.shape

    # max softmax probability == 1 / sum_j exp(logit_j - max_logit)
    m = jnp.max(logits, axis=-1, keepdims=True)                    # (TB, 1)
    denom = jnp.sum(jnp.exp(logits - m), axis=-1, keepdims=True)   # (TB, 1)
    conf = 1.0 / denom  # exact divide (pl.reciprocal(approx) could shift bins)

    # argmax with first-maximal-index tie breaking (same as torch.max).
    # TODO(synk): on v7x a relaxed "label logit == max" accuracy check would
    # drop one lane reduce, but it changes behavior on exact float ties.
    col = lax.broadcasted_iota(jnp.int32, (tb, c), 1)
    pred = jnp.min(jnp.where(logits == m, col, c), axis=-1, keepdims=True)

    # Rows past the true batch size (final partial block, or duplicate blocks
    # from the clamped index maps of the 2-core split) contain unspecified
    # data: mask with `where`, never with a multiply, so NaN garbage cannot
    # leak into the sums.  `row` uses the UNCLAMPED block index so duplicates
    # land past n_total and contribute zero.
    row = (p * pl.num_programs(1) + b) * tb \
        + lax.broadcasted_iota(jnp.int32, (tb, 1), 0)
    valid = row < n_total                                          # (TB, 1) bool

    conf = jnp.where(valid, conf, 0.0)
    correct = jnp.where(valid & (pred == labels), 1.0, 0.0)

    # bin k covers (k/n_bins, (k+1)/n_bins]  ->  k = ceil(conf * n_bins) - 1
    bin_idx = jnp.clip(jnp.ceil(conf * n_bins).astype(jnp.int32) - 1, 0, n_bins - 1)
    lane = lax.broadcasted_iota(jnp.int32, (tb, LANES), 1)
    in_bin = jnp.where((bin_idx == lane) & valid, 1.0, 0.0)        # (TB, LANES)

    # One small MXU matmul replaces three (TB, LANES) sublane reductions:
    #   hist[r, k] += sum_i v[i, r] * in_bin[i, k]
    # `v` is built with where-against-lane-iota (no lane-narrow concatenate)
    # and the batch contraction is expressed directly via dot_general (no
    # materialized transpose / XLU relayout).
    lane8 = lax.broadcasted_iota(jnp.int32, (tb, 8), 1)
    v = jnp.where(lane8 == 0, 1.0,
        jnp.where(lane8 == 1, conf,
        jnp.where(lane8 == 2, correct, 0.0)))                      # (TB, 8) f32
    hist_ref[...] += lax.dot_general(
        v, in_bin,
        dimension_numbers=(((0,), (0,)), ((), ())),                # contract over TB
        preferred_element_type=jnp.float32)                        # (8, LANES)


def ece_loss(logits, labels, n_bins=N_BINS, block_rows=None, num_parallel=2):
    """Pallas ECE.  logits: (N, C) float (f32/bf16), labels: (N,) int.
    Returns shape (1,) f32 (same semantics as _ECELoss.forward)."""
    assert n_bins <= LANES
    N, C = logits.shape
    itemsize = np.dtype(logits.dtype).itemsize

    gen = _tpu_generation()
    vmem_limit = _VMEM_LIMIT_BYTES.get(gen, _VMEM_LIMIT_BYTES["unknown"])

    if block_rows is None:
        block_rows = _auto_block_rows(C, itemsize, vmem_limit)
    block_rows = int(max(128, (block_rows // 128) * 128))   # 128-aligned tiles
    block_rows = min(block_rows, _round_up(N, 128))

    n_blocks = int(pl.cdiv(N, block_rows))
    # Unconditional 2-way split of the batch over TensorCores (v7x megacore).
    # Odd block counts no longer forfeit a core: block indices are clamped in
    # the index maps below and duplicate blocks contribute zero via the
    # in-kernel row mask.  Harmless on single-core v5e/v6e.
    p_dim = num_parallel if n_blocks >= num_parallel else 1
    b_dim = int(pl.cdiv(n_blocks, p_dim))

    # No wrapper-side pad/astype of logits: read native dtype straight from HBM.
    labels2d = labels.astype(jnp.int32).reshape(N, 1)

    def _blk_index(p, b):
        t = jnp.minimum(p * b_dim + b, n_blocks - 1)   # clamp duplicate blocks
        return (t, 0)

    kernel = functools.partial(_ece_hist_kernel, n_total=N, n_bins=n_bins)
    hist = pl.pallas_call(
        kernel,
        out_shape=jax.ShapeDtypeStruct((p_dim, 8, LANES), jnp.float32),
        grid_spec=pltpu.PrefetchScalarGridSpec(
            num_scalar_prefetch=0,
            grid=(p_dim, b_dim),
            in_specs=[
                # TODO(synk): if a v7x trace shows exposed DMA at tile edges,
                # try pipeline_mode=pl.Buffered(3) here and shrink block_rows.
                pl.BlockSpec((block_rows, C), _blk_index),
                pl.BlockSpec((block_rows, 1), _blk_index),
            ],
            out_specs=pl.BlockSpec((None, 8, LANES), lambda p, b: (p, 0, 0)),
        ),
        compiler_params=pltpu.CompilerParams(
            dimension_semantics=("parallel", "arbitrary"),
            vmem_limit_bytes=vmem_limit),
    )(logits, labels2d)

    # Tiny epilogue: combine the per-core partial histograms and reduce to ECE.
    hist = jnp.sum(hist, axis=0)                    # (8, LANES)
    cnt, sconf, sacc = hist[0], hist[1], hist[2]
    nonempty = cnt > 0.0
    prop = cnt / float(N)
    gap = jnp.abs(sconf - sacc) / jnp.maximum(cnt, 1.0)
    return jnp.sum(jnp.where(nonempty, gap * prop, 0.0)).reshape(1)


def ece_reference(logits, labels, n_bins=N_BINS):
    """Pure-JAX reference matching the PyTorch forward."""
    sm = jax.nn.softmax(logits.astype(jnp.float32), axis=1)
    conf = jnp.max(sm, axis=1)
    pred = jnp.argmax(sm, axis=1)
    acc = (pred == labels).astype(jnp.float32)
    bounds = np.linspace(0.0, 1.0, n_bins + 1)
    ece = jnp.zeros((1,), jnp.float32)
    for lo, hi in zip(bounds[:-1], bounds[1:]):
        in_bin = (conf > lo) & (conf <= hi)
        n_in = jnp.sum(in_bin.astype(jnp.float32))
        prop = n_in / conf.shape[0]
        safe = jnp.maximum(n_in, 1.0)
        acc_in = jnp.sum(jnp.where(in_bin, acc, 0.0)) / safe
        conf_in = jnp.sum(jnp.where(in_bin, conf, 0.0)) / safe
        ece = ece + jnp.where(prop > 0, jnp.abs(conf_in - acc_in) * prop, 0.0)
    return ece


if __name__ == "__main__":
    key = jax.random.PRNGKey(0)
    k1, k2, k3, k4 = jax.random.split(key, 4)

    # Small case: N not a multiple of the 128-row tile exercises the row mask.
    N, C = 50, 16
    logits = 2.0 * jax.random.normal(k1, (N, C), dtype=jnp.float32)
    labels = jax.random.randint(k2, (N,), 0, C, dtype=jnp.int32)
    ece = jax.block_until_ready(ece_loss(logits, labels))
    ref = jax.block_until_ready(ece_reference(logits, labels))
    assert ece.shape == (1,)
    np.testing.assert_allclose(np.asarray(ece), np.asarray(ref), rtol=1e-5, atol=1e-5)

    # Multi-block case with an ODD block count (3): exercises the unconditional
    # 2-core split with clamped index maps + duplicate-block masking, plus a
    # partial final block (300 = 2*128 + 44).
    N2, C2 = 300, 16
    logits2 = 2.0 * jax.random.normal(k3, (N2, C2), dtype=jnp.float32)
    labels2 = jax.random.randint(k4, (N2,), 0, C2, dtype=jnp.int32)
    ece2 = jax.block_until_ready(ece_loss(logits2, labels2, block_rows=128))
    ref2 = jax.block_until_ready(ece_reference(logits2, labels2))
    np.testing.assert_allclose(np.asarray(ece2), np.asarray(ref2), rtol=1e-5, atol=1e-5)

    print("KERNEL_OK")
</pallas_src>

<mosaic_0001>
module attributes {stable_mosaic.version = 11 : i64} {
  func.func @_ece_hist_kernel(%arg0: i32, %arg1: i32, %arg2: memref<128x16xf32, #tpu.memory_space<vmem>>, %arg3: memref<128x1xi32, #tpu.memory_space<vmem>>, %arg4: memref<1x8x128xf32, #tpu.memory_space<vmem>>) attributes {dimension_semantics = [#tpu.dimension_semantics<parallel>, #tpu.dimension_semantics<arbitrary>], iteration_bounds = array<i64: 1, 1>, scalar_prefetch = 0 : i64, scratch_operands = 0 : i64, tpu.core_type = #tpu.core_type<tc>, window_params = [{transform_indices = @transform_0, window_bounds = array<i64: 128, 16>}, {transform_indices = @transform_1, window_bounds = array<i64: 128, 1>}, {transform_indices = @transform_2, window_bounds = array<i64: 1, 8, 128>}]} {
    %c0_i32 = arith.constant 0 : i32
    %0 = arith.cmpi eq, %arg1, %c0_i32 : i32
    %1 = arith.extui %0 : i1 to i32
    %c0_i32_0 = arith.constant 0 : i32
    %2 = arith.cmpi ne, %1, %c0_i32_0 : i32
    scf.if %2 {
      %cst_26 = arith.constant 0.000000e+00 : f32
      %77 = vector.broadcast %cst_26 : f32 to vector<8x128xf32>
      %c0_27 = arith.constant 0 : index
      %c0_28 = arith.constant 0 : index
      %c0_29 = arith.constant 0 : index
      %78 = vector.load %arg4[%c0_27, %c0_28, %c0_29] : memref<1x8x128xf32, #tpu.memory_space<vmem>>, vector<1x8x128xf32>
      %79 = vector.shape_cast %78 : vector<1x8x128xf32> to vector<8x128xf32>
      %80 = vector.shape_cast %77 : vector<8x128xf32> to vector<1x8x128xf32>
      tpu.vector_store %arg4[%c0_27, %c0_28, %c0_29], %80 {strides = array<i32>} : memref<1x8x128xf32, #tpu.memory_space<vmem>>, vector<1x8x128xf32>,
    } else {
    }
    %c0 = arith.constant 0 : index
    %c0_1 = arith.constant 0 : index
    %3 = vector.load %arg2[%c0, %c0_1] : memref<128x16xf32, #tpu.memory_space<vmem>>, vector<128x16xf32>
    %c0_2 = arith.constant 0 : index
    %c0_3 = arith.constant 0 : index
    %4 = vector.load %arg3[%c0_2, %c0_3] : memref<128x1xi32, #tpu.memory_space<vmem>>, vector<128x1xi32>
    %cst = arith.constant dense<0xFF800000> : vector<128xf32>
    %5 = vector.multi_reduction <maximumf>, %3, %cst [1] : vector<128x16xf32> to vector<128xf32>
    %6 = vector.shape_cast %5 : vector<128xf32> to vector<128x1xf32>
    %7 = vector.broadcast %6 : vector<128x1xf32> to vector<128x16xf32>
    %8 = arith.subf %3, %7 : vector<128x16xf32>
    %9 = math.exp %8 : vector<128x16xf32>
    %cst_4 = arith.constant dense<0.000000e+00> : vector<128xf32>
    %10 = vector.multi_reduction <add>, %9, %cst_4 [1] : vector<128x16xf32> to vector<128xf32>
    %11 = vector.shape_cast %10 : vector<128xf32> to vector<128x1xf32>
    %cst_5 = arith.constant 1.000000e+00 : f32
    %12 = vector.broadcast %cst_5 : f32 to vector<128x1xf32>
    %13 = arith.divf %12, %11 : vector<128x1xf32>
    %14 = tpu.iota {dimensions = array<i32: 1>} : vector<128x16xi32>
    %15 = vector.broadcast %6 : vector<128x1xf32> to vector<128x16xf32>
    %16 = arith.cmpf oeq, %3, %15 : vector<128x16xf32>
    %c16_i32 = arith.constant 16 : i32
    %17 = vector.broadcast %c16_i32 : i32 to vector<128x16xi32>
    %18 = arith.select %16, %14, %17 : vector<128x16xi1>, vector<128x16xi32>
    %cst_6 = arith.constant dense<2147483647> : vector<128xi32>
    %19 = vector.multi_reduction <minsi>, %18, %cst_6 [1] : vector<128x16xi32> to vector<128xi32>
    %20 = vector.shape_cast %19 : vector<128xi32> to vector<128x1xi32>
    %c1_i32 = arith.constant 1 : i32
    %21 = arith.muli %arg0, %c1_i32 : i32
    %22 = arith.addi %21, %arg1 : i32
    %c128_i32 = arith.constant 128 : i32
    %23 = arith.muli %22, %c128_i32 : i32
    %24 = tpu.iota {dimensions = array<i32: 0>} : vector<128x1xi32>
    %25 = vector.broadcast %23 : i32 to vector<128x1xi32>
    %26 = arith.addi %25, %24 : vector<128x1xi32>
    %c50_i32 = arith.constant 50 : i32
    %27 = vector.broadcast %c50_i32 : i32 to vector<128x1xi32>
    %28 = arith.cmpi slt, %26, %27 : vector<128x1xi32>
    %cst_7 = arith.constant 0.000000e+00 : f32
    %29 = vector.broadcast %cst_7 : f32 to vector<128x1xf32>
    %30 = arith.select %28, %13, %29 : vector<128x1xi1>, vector<128x1xf32>
    %31 = arith.cmpi eq, %20, %4 : vector<128x1xi32>
    %32 = arith.andi %28, %31 : vector<128x1xi1>
    %cst_8 = arith.constant 1.000000e+00 : f32
    %cst_9 = arith.constant 0.000000e+00 : f32
    %33 = vector.broadcast %cst_8 : f32 to vector<128x1xf32>
    %34 = vector.broadcast %cst_9 : f32 to vector<128x1xf32>
    %35 = arith.select %32, %33, %34 : vector<128x1xi1>, vector<128x1xf32>
    %cst_10 = arith.constant 1.500000e+01 : f32
    %36 = vector.broadcast %cst_10 : f32 to vector<128x1xf32>
    %37 = arith.mulf %30, %36 : vector<128x1xf32>
    %38 = math.ceil %37 : vector<128x1xf32>
    %39 = arith.fptosi %38 : vector<128x1xf32> to vector<128x1xi32>
    %c1_i32_11 = arith.constant 1 : i32
    %40 = vector.broadcast %c1_i32_11 : i32 to vector<128x1xi32>
    %41 = arith.subi %39, %40 : vector<128x1xi32>
    %c0_i32_12 = arith.constant 0 : i32
    %c14_i32 = arith.constant 14 : i32
    %42 = vector.broadcast %c0_i32_12 : i32 to vector<128x1xi32>
    %43 = arith.maxsi %42, %41 : vector<128x1xi32>
    %44 = vector.broadcast %c14_i32 : i32 to vector<128x1xi32>
    %45 = arith.minsi %44, %43 : vector<128x1xi32>
    %46 = tpu.iota {dimensions = array<i32: 1>} : vector<128x128xi32>
    %47 = vector.broadcast %45 : vector<128x1xi32> to vector<128x128xi32>
    %48 = arith.cmpi eq, %47, %46 : vector<128x128xi32>
    %49 = vector.broadcast %28 : vector<128x1xi1> to vector<128x128xi1>
    %50 = arith.andi %48, %49 : vector<128x128xi1>
    %cst_13 = arith.constant 1.000000e+00 : f32
    %cst_14 = arith.constant 0.000000e+00 : f32
    %51 = vector.broadcast %cst_13 : f32 to vector<128x128xf32>
    %52 = vector.broadcast %cst_14 : f32 to vector<128x128xf32>
    %53 = arith.select %50, %51, %52 : vector<128x128xi1>, vector<128x128xf32>
    %54 = tpu.iota {dimensions = array<i32: 1>} : vector<128x8xi32>
    %c0_i32_15 = arith.constant 0 : i32
    %55 = vector.broadcast %c0_i32_15 : i32 to vector<128x8xi32>
    %56 = arith.cmpi eq, %54, %55 : vector<128x8xi32>
    %c1_i32_16 = arith.constant 1 : i32
    %57 = vector.broadcast %c1_i32_16 : i32 to vector<128x8xi32>
    %58 = arith.cmpi eq, %54, %57 : vector<128x8xi32>
    %c2_i32 = arith.constant 2 : i32
    %59 = vector.broadcast %c2_i32 : i32 to vector<128x8xi32>
    %60 = arith.cmpi eq, %54, %59 : vector<128x8xi32>
    %cst_17 = arith.constant 0.000000e+00 : f32
    %61 = vector.shape_cast %35 : vector<128x1xf32> to vector<128x1xf32>
    %62 = vector.broadcast %61 : vector<128x1xf32> to vector<128x8xf32>
    %63 = vector.broadcast %cst_17 : f32 to vector<128x8xf32>
    %64 = arith.select %60, %62, %63 : vector<128x8xi1>, vector<128x8xf32>
    %65 = vector.shape_cast %30 : vector<128x1xf32> to vector<128x1xf32>
    %66 = vector.broadcast %65 : vector<128x1xf32> to vector<128x8xf32>
    %67 = arith.select %58, %66, %64 : vector<128x8xi1>, vector<128x8xf32>
    %cst_18 = arith.constant 1.000000e+00 : f32
    %68 = vector.broadcast %cst_18 : f32 to vector<128x8xf32>
    %69 = arith.select %56, %68, %67 : vector<128x8xi1>, vector<128x8xf32>
    %c0_19 = arith.constant 0 : index
    %c0_20 = arith.constant 0 : index
    %c0_21 = arith.constant 0 : index
    %70 = vector.load %arg4[%c0_19, %c0_20, %c0_21] : memref<1x8x128xf32, #tpu.memory_space<vmem>>, vector<1x8x128xf32>
    %71 = vector.shape_cast %70 : vector<1x8x128xf32> to vector<8x128xf32>
    %cst_22 = arith.constant dense<0.000000e+00> : vector<8x128xf32>
    %72 = tpu.matmul %69, %53, %cst_22 {dimension_numbers = #tpu.dot_dimension_numbers<[0], [0], [1], [1], [0, 1, 1, 1], [], []>} : vector<128x8xf32>, vector<128x128xf32>, vector<8x128xf32> -> vector<8x128xf32>
    %73 = arith.addf %71, %72 : vector<8x128xf32>
    %c0_23 = arith.constant 0 : index
    %c0_24 = arith.constant 0 : index
    %c0_25 = arith.constant 0 : index
    %74 = vector.load %arg4[%c0_23, %c0_24, %c0_25] : memref<1x8x128xf32, #tpu.memory_space<vmem>>, vector<1x8x128xf32>
    %75 = vector.shape_cast %74 : vector<1x8x128xf32> to vector<8x128xf32>
    %76 = vector.shape_cast %73 : vector<8x128xf32> to vector<1x8x128xf32>
    tpu.vector_store %arg4[%c0_23, %c0_24, %c0_25], %76 {strides = array<i32>} : memref<1x8x128xf32, #tpu.memory_space<vmem>>, vector<1x8x128xf32>,
    return
  }
  func.func @transform_0(%arg0: i32, %arg1: i32) -> (i32, i32) {
    %c1_i32 = arith.constant 1 : i32
    %0 = arith.muli %arg0, %c1_i32 : i32
    %1 = arith.addi %0, %arg1 : i32
    %c0_i32 = arith.constant 0 : i32
    %2 = arith.minsi %1, %c0_i32 : i32
    %c0_i32_0 = arith.constant 0 : i32
    %c0_i32_1 = arith.constant 0 : i32
    return %2, %c0_i32_0 : i32, i32
  }
  func.func @transform_1(%arg0: i32, %arg1: i32) -> (i32, i32) {
    %c1_i32 = arith.constant 1 : i32
    %0 = arith.muli %arg0, %c1_i32 : i32
    %1 = arith.addi %0, %arg1 : i32
    %c0_i32 = arith.constant 0 : i32
    %2 = arith.minsi %1, %c0_i32 : i32
    %c0_i32_0 = arith.constant 0 : i32
    %c0_i32_1 = arith.constant 0 : i32
    return %2, %c0_i32_0 : i32, i32
  }
  func.func @transform_2(%arg0: i32, %arg1: i32) -> (i32, i32, i32) {
    %c0_i32 = arith.constant 0 : i32
    %c0_i32_0 = arith.constant 0 : i32
    %c0_i32_1 = arith.constant 0 : i32
    return %arg0, %c0_i32, %c0_i32_0 : i32, i32, i32
  }
}

</mosaic_0001>

<llo_original>
// kernel: tpu_custom_call.1
$region0: #{tpu_custom_call.1}
  #allocation0 [shape = 'u32[]', space=smem, size = 0x4, offset = 0x4, fixed_abs, tag = 'smem constant byte address 0x4 - core index']
  #allocation1 [shape = 'u32[144,128]{1,0:T(1,128)}', space=vmem, size = 0x12000, scoped, tag = 'internal scratch']
  %s0 = inlined_call_operand.vmem [shape: f32[50,16], index: 0, kind: input, shape index: {}]
  %s1 = inlined_call_operand.vmem [shape: s32[50,1], index: 1, kind: input, shape index: {}]
  %s2 = inlined_call_operand.hbm [shape: f32[1,8,128], index: 2, kind: output, shape index: {}]
  %s3 = sld [smem:[#allocation0]]
  $region22: #{tpu_custom_call.1} parent=0
    _
  %s5 = ssub.s32 1, %s3
  %s6 = scalar_select 0, %s5, %s3
  $region1: #{tpu_custom_call.1} parent=0
    #allocation2 [shape = 'u8[4096]{0}', space=vmem, size = 0x1000, scoped, tag = 'output window, operand 0, single buffered']
    #allocation3 [shape = 's32[1]{0}', space=sflag, size = 0x4, scoped, tag = 'scoped memory for tpu_custom_call.1']
    %7 = vsyncpa [#allocation3], 0
    // Predicated region
    $region2: #{tpu_custom_call.1} parent=1 // pred_check
      _
    $region3: #{tpu_custom_call.1} parent=1 // pred_check_branch
      %9 = sbr.rel (0) target = $region5
    $region4: #{tpu_custom_call.1} parent=1 // pred_region
      %s10 = sadd.s32 0, 0
      %p11 = scmp.lt.s32.totalorder %s10, 0
      %s12 = scalar_select %p11, %s10, 0
      %s13 = smul.u32 16, %s12
      %s14 = ssub.s32 7, %s13
      %s15 = smul.u32 128, %s14
      %p16 = scmp.lt.s32.totalorder %s13, 6
      %s17 = scalar_select %p16, %s13, 6
      %s18 = smul.addr %s17, 8
      %s19 = scalar_lea.vmem %s0, %s18
      %s20 = sadd.s32 0, 0
      %p21 = scmp.lt.s32.totalorder %s20, 0
      %s22 = scalar_select %p21, %s20, 0
      %s23 = smul.u32 16, %s22
      %s24 = ssub.s32 7, %s23
      %s25 = smul.u32 128, %s24
    $region5: #{tpu_custom_call.1} parent=1 // pred_fallthru
      _
    // Predicated region
    $region6: #{tpu_custom_call.1} parent=1 // pred_check
      _
    $region7: #{tpu_custom_call.1} parent=1 // pred_check_branch
      %27 = sbr.rel (0) target = $region9
    $region8: #{tpu_custom_call.1} parent=1 // pred_region
      %s28 = sadd.s32 0, 0
      %p29 = scmp.lt.s32.totalorder %s28, 0
      %s30 = scalar_select %p29, %s28, 0
      %s31 = smul.u32 16, %s30
      %s32 = ssub.s32 7, %s31
      %s33 = smul.u32 128, %s32
      %p34 = scmp.lt.s32.totalorder %s31, 6
      %s35 = scalar_select %p34, %s31, 6
      %s36 = smul.addr %s35, 8
      %s37 = scalar_lea.vmem %s1, %s36
      %s38 = sadd.s32 0, 0
      %p39 = scmp.lt.s32.totalorder %s38, 0
      %s40 = scalar_select %p39, %s38, 0
      %s41 = smul.u32 16, %s40
      %s42 = ssub.s32 7, %s41
      %s43 = smul.u32 128, %s42
    $region9: #{tpu_custom_call.1} parent=1 // pred_fallthru
      _
    %s44 = sadd.s32 0, 0
    %p45 = scmp.lt.s32.totalorder %s44, 0
    %s46 = scalar_select %p45, %s44, 0
    %s47 = smul.u32 16, %s46
    %s48 = ssub.s32 7, %s47
    %s49 = smul.u32 128, %s48
    %p50 = scmp.lt.s32.totalorder %s47, 6
    %s51 = scalar_select %p50, %s47, 6
    %s52 = smul.addr %s51, 8
    %s53 = scalar_lea.vmem %s0, %s52
    %s54 = sadd.s32 0, 0
    %p55 = scmp.lt.s32.totalorder %s54, 0
    %s56 = scalar_select %p55, %s54, 0
    %s57 = smul.u32 16, %s56
    %s58 = ssub.s32 7, %s57
    %s59 = smul.u32 128, %s58
    %p60 = scmp.lt.s32.totalorder %s57, 6
    %s61 = scalar_select %p60, %s57, 6
    %s62 = smul.addr %s61, 8
    %s63 = scalar_lea.vmem %s1, %s62
    %s64 = sadd.s32 0, 0
    %p65 = scmp.lt.s32.totalorder %s64, 0
    %s66 = scalar_select %p65, %s64, 0
    %s67 = smul.u32 16, %s66
    %s68 = ssub.s32 7, %s67
    %s69 = smul.u32 128, %s68
    %p70 = scmp.lt.s32.totalorder %s67, 6
    %s71 = scalar_select %p70, %s67, 6
    %s72 = smul.addr %s71, 8
    %s73 = scalar_lea.vmem %s0, %s72
    %s74 = sadd.s32 0, 0
    %p75 = scmp.lt.s32.totalorder %s74, 0
    %s76 = scalar_select %p75, %s74, 0
    %s77 = smul.u32 16, %s76
    %s78 = ssub.s32 7, %s77
    %s79 = smul.u32 128, %s78
    %s80 = sadd.s32 0, 0
    %p81 = scmp.lt.s32.totalorder %s80, 0
    %s82 = scalar_select %p81, %s80, 0
    %s83 = smul.u32 16, %s82
    %s84 = ssub.s32 7, %s83
    %s85 = smul.u32 128, %s84
    %p86 = scmp.lt.s32.totalorder %s83, 6
    %s87 = scalar_select %p86, %s83, 6
    %s88 = smul.addr %s87, 8
    %s89 = scalar_lea.vmem %s1, %s88
    %s90 = sadd.s32 0, 0
    %p91 = scmp.lt.s32.totalorder %s90, 0
    %s92 = scalar_select %p91, %s90, 0
    %s93 = smul.u32 16, %s92
    %s94 = ssub.s32 7, %s93
    %s95 = smul.u32 128, %s94
    %p96 = scmp.eq.s32.totalorder 0, 0
    // Predicated region
    $region10: #{tpu_custom_call.1} parent=1 // pred_check
      %p97 = pneg %p96
    $region11: #{tpu_custom_call.1} parent=1 // pred_check_branch
      %99 = sbr.rel (%p97) target = $region13
    $region12: #{tpu_custom_call.1} parent=1 // pred_region
      %100 = vst [vmem:[#allocation2] sm:$0xff] 0.0
    $region13: #{tpu_custom_call.1} parent=1 // pred_fallthru
      _
    %v101 = vld [vmem:[%s73] sm:$0xff]
    %v102 = vld [vmem:[%s73 + $0x8] sm:$0xff]
    %v103 = vld [vmem:[%s73 + $0x10] sm:$0xff]
    %v104 = vld [vmem:[%s73 + $0x18] sm:$0xff]
    %v105 = vld [vmem:[%s73 + $0x20] sm:$0xff]
    %v106 = vld [vmem:[%s73 + $0x28] sm:$0xff]
    %v107 = vld [vmem:[%s73 + $0x30] sm:$0xff]
    %v108 = vld [vmem:[%s73 + $0x38] sm:$0xff]
    %v109 = vld [vmem:[%s73 + $0x40] sm:$0xff]
    %v110 = vld [vmem:[%s73 + $0x48] sm:$0xff]
    %v111 = vld [vmem:[%s73 + $0x50] sm:$0xff]
    %v112 = vld [vmem:[%s73 + $0x58] sm:$0xff]
    %v113 = vld [vmem:[%s73 + $0x60] sm:$0xff]
    %v114 = vld [vmem:[%s73 + $0x68] sm:$0xff]
    %v115 = vld [vmem:[%s73 + $0x70] sm:$0xff]
    %v116 = vld [vmem:[%s73 + $0x78] sm:$0xff]
    %v117 = vld [vmem:[%s89] sm:$0xff]
    %v118 = vld [vmem:[%s89 + $0x8] sm:$0xff]
    %v119 = vld [vmem:[%s89 + $0x10] sm:$0xff]
    %v120 = vld [vmem:[%s89 + $0x18] sm:$0xff]
    %v121 = vld [vmem:[%s89 + $0x20] sm:$0xff]
    %v122 = vld [vmem:[%s89 + $0x28] sm:$0xff]
    %v123 = vld [vmem:[%s89 + $0x30] sm:$0xff]
    %v124 = vld [vmem:[%s89 + $0x38] sm:$0xff]
    %v125 = vld [vmem:[%s89 + $0x40] sm:$0xff]
    %v126 = vld [vmem:[%s89 + $0x48] sm:$0xff]
    %v127 = vld [vmem:[%s89 + $0x50] sm:$0xff]
    %v128 = vld [vmem:[%s89 + $0x58] sm:$0xff]
    %v129 = vld [vmem:[%s89 + $0x60] sm:$0xff]
    %v130 = vld [vmem:[%s89 + $0x68] sm:$0xff]
    %v131 = vld [vmem:[%s89 + $0x70] sm:$0xff]
    %v132 = vld [vmem:[%s89 + $0x78] sm:$0xff]
    %vm133 = vcmask 130048
    %v134 = vsel %vm133, %v101, -inf
    %135 = vmax.xlane.f32.xlu0 %v134
    %v136 = vpop.xlane.xlu0 %135
    %v137 = vsel %vm133, %v102, -inf
    %138 = vmax.xlane.f32.xlu0 %v137
    %v139 = vpop.xlane.xlu0 %138
    %v140 = vsel %vm133, %v103, -inf
    %141 = vmax.xlane.f32.xlu0 %v140
    %v142 = vpop.xlane.xlu0 %141
    %v143 = vsel %vm133, %v104, -inf
    %144 = vmax.xlane.f32.xlu0 %v143
    %v145 = vpop.xlane.xlu0 %144
    %v146 = vsel %vm133, %v105, -inf
    %147 = vmax.xlane.f32.xlu0 %v146
    %v148 = vpop.xlane.xlu0 %147
    %v149 = vsel %vm133, %v106, -inf
    %150 = vmax.xlane.f32.xlu0 %v149
    %v151 = vpop.xlane.xlu0 %150
    %v152 = vsel %vm133, %v107, -inf
    %153 = vmax.xlane.f32.xlu0 %v152
    %v154 = vpop.xlane.xlu0 %153
    %v155 = vsel %vm133, %v108, -inf
    %156 = vmax.xlane.f32.xlu0 %v155
    %v157 = vpop.xlane.xlu0 %156
    %v158 = vsel %vm133, %v109, -inf
    %159 = vmax.xlane.f32.xlu0 %v158
    %v160 = vpop.xlane.xlu0 %159
    %v161 = vsel %vm133, %v110, -inf
    %162 = vmax.xlane.f32.xlu0 %v161
    %v163 = vpop.xlane.xlu0 %162
    %v164 = vsel %vm133, %v111, -inf
    %165 = vmax.xlane.f32.xlu0 %v164
    %v166 = vpop.xlane.xlu0 %165
    %v167 = vsel %vm133, %v112, -inf
    %168 = vmax.xlane.f32.xlu0 %v167
    %v169 = vpop.xlane.xlu0 %168
    %v170 = vsel %vm133, %v113, -inf
    %171 = vmax.xlane.f32.xlu0 %v170
    %v172 = vpop.xlane.xlu0 %171
    %v173 = vsel %vm133, %v114, -inf
    %174 = vmax.xlane.f32.xlu0 %v173
    %v175 = vpop.xlane.xlu0 %174
    %v176 = vsel %vm133, %v115, -inf
    %177 = vmax.xlane.f32.xlu0 %v176
    %v178 = vpop.xlane.xlu0 %177
    %v179 = vsel %vm133, %v116, -inf
    %180 = vmax.xlane.f32.xlu0 %v179
    %v181 = vpop.xlane.xlu0 %180
    %v182 = vsub.f32 %v101, %v136
    %v183 = vsub.f32 %v102, %v139
    %v184 = vsub.f32 %v103, %v142
    %v185 = vsub.f32 %v104, %v145
    %v186 = vsub.f32 %v105, %v148
    %v187 = vsub.f32 %v106, %v151
    %v188 = vsub.f32 %v107, %v154
    %v189 = vsub.f32 %v108, %v157
    %v190 = vsub.f32 %v109, %v160
    %v191 = vsub.f32 %v110, %v163
    %v192 = vsub.f32 %v111, %v166
    %v193 = vsub.f32 %v112, %v169
    %v194 = vsub.f32 %v113, %v172
    %v195 = vsub.f32 %v114, %v175
    %v196 = vsub.f32 %v115, %v178
    %v197 = vsub.f32 %v116, %v181
    %v198 = vmul.f32 %v182, 1.442695
    %v199 = vpow.pop %v198
    %v200 = vmul.f32 %v183, 1.442695
    %v201 = vpow.pop %v200
    %v202 = vmul.f32 %v184, 1.442695
    %v203 = vpow.pop %v202
    %v204 = vmul.f32 %v185, 1.442695
    %v205 = vpow.pop %v204
    %v206 = vmul.f32 %v186, 1.442695
    %v207 = vpow.pop %v206
    %v208 = vmul.f32 %v187, 1.442695
    %v209 = vpow.pop %v208
    %v210 = vmul.f32 %v188, 1.442695
    %v211 = vpow.pop %v210
    %v212 = vmul.f32 %v189, 1.442695
    %v213 = vpow.pop %v212
    %v214 = vmul.f32 %v190, 1.442695
    %v215 = vpow.pop %v214
    %v216 = vmul.f32 %v191, 1.442695
    %v217 = vpow.pop %v216
    %v218 = vmul.f32 %v192, 1.442695
    %v219 = vpow.pop %v218
    %v220 = vmul.f32 %v193, 1.442695
    %v221 = vpow.pop %v220
    %v222 = vmul.f32 %v194, 1.442695
    %v223 = vpow.pop %v222
    %v224 = vmul.f32 %v195, 1.442695
    %v225 = vpow.pop %v224
    %v226 = vmul.f32 %v196, 1.442695
    %v227 = vpow.pop %v226
    %v228 = vmul.f32 %v197, 1.442695
    %v229 = vpow.pop %v228
    %v230 = vsel %vm133, %v199, 0.0
    %231 = vadd.xlane.f32.xlu0 %v230
    %v232 = vpop.xlane.xlu0 %231
    %v233 = vsel %vm133, %v201, 0.0
    %234 = vadd.xlane.f32.xlu0 %v233
    %v235 = vpop.xlane.xlu0 %234
    %v236 = vsel %vm133, %v203, 0.0
    %237 = vadd.xlane.f32.xlu0 %v236
    %v238 = vpop.xlane.xlu0 %237
    %v239 = vsel %vm133, %v205, 0.0
    %240 = vadd.xlane.f32.xlu0 %v239
    %v241 = vpop.xlane.xlu0 %240
    %v242 = vsel %vm133, %v207, 0.0
    %243 = vadd.xlane.f32.xlu0 %v242
    %v244 = vpop.xlane.xlu0 %243
    %v245 = vsel %vm133, %v209, 0.0
    %246 = vadd.xlane.f32.xlu0 %v245
    %v247 = vpop.xlane.xlu0 %246
    %v248 = vsel %vm133, %v211, 0.0
    %249 = vadd.xlane.f32.xlu0 %v248
    %v250 = vpop.xlane.xlu0 %249
    %v251 = vsel %vm133, %v213, 0.0
    %252 = vadd.xlane.f32.xlu0 %v251
    %v253 = vpop.xlane.xlu0 %252
    %v254 = vsel %vm133, %v215, 0.0
    %255 = vadd.xlane.f32.xlu0 %v254
    %v256 = vpop.xlane.xlu0 %255
    %v257 = vsel %vm133, %v217, 0.0
    %258 = vadd.xlane.f32.xlu0 %v257
    %v259 = vpop.xlane.xlu0 %258
    %v260 = vsel %vm133, %v219, 0.0
    %261 = vadd.xlane.f32.xlu0 %v260
    %v262 = vpop.xlane.xlu0 %261
    %v263 = vsel %vm133, %v221, 0.0
    %264 = vadd.xlane.f32.xlu0 %v263
    %v265 = vpop.xlane.xlu0 %264
    %v266 = vsel %vm133, %v223, 0.0
    %267 = vadd.xlane.f32.xlu0 %v266
    %v268 = vpop.xlane.xlu0 %267
    %v269 = vsel %vm133, %v225, 0.0
    %270 = vadd.xlane.f32.xlu0 %v269
    %v271 = vpop.xlane.xlu0 %270
    %v272 = vsel %vm133, %v227, 0.0
    %273 = vadd.xlane.f32.xlu0 %v272
    %v274 = vpop.xlane.xlu0 %273
    %v275 = vsel %vm133, %v229, 0.0
    %276 = vadd.xlane.f32.xlu0 %v275
    %v277 = vpop.xlane.xlu0 %276
    %v278 = vrcp.pop %v232
    %v279 = vmul.f32 1.0, %v278
    %v280 = vrcp.pop %v235
    %v281 = vmul.f32 1.0, %v280
    %v282 = vrcp.pop %v238
    %v283 = vmul.f32 1.0, %v282
    %v284 = vrcp.pop %v241
    %v285 = vmul.f32 1.0, %v284
    %v286 = vrcp.pop %v244
    %v287 = vmul.f32 1.0, %v286
    %v288 = vrcp.pop %v247
    %v289 = vmul.f32 1.0, %v288
    %v290 = vrcp.pop %v250
    %v291 = vmul.f32 1.0, %v290
    %v292 = vrcp.pop %v253
    %v293 = vmul.f32 1.0, %v292
    %v294 = vrcp.pop %v256
    %v295 = vmul.f32 1.0, %v294
    %v296 = vrcp.pop %v259
    %v297 = vmul.f32 1.0, %v296
    %v298 = vrcp.pop %v262
    %v299 = vmul.f32 1.0, %v298
    %v300 = vrcp.pop %v265
    %v301 = vmul.f32 1.0, %v300
    %v302 = vrcp.pop %v268
    %v303 = vmul.f32 1.0, %v302
    %v304 = vrcp.pop %v271
    %v305 = vmul.f32 1.0, %v304
    %v306 = vrcp.pop %v274
    %v307 = vmul.f32 1.0, %v306
    %v308 = vrcp.pop %v277
    %v309 = vmul.f32 1.0, %v308
    %v310 = vlaneseq
    %v311 = vand.u32 %v310, 127
    %vm312 = vcmp.eq.f32.partialorder %v101, %v136
    %vm313 = vcmp.eq.f32.partialorder %v102, %v139
    %vm314 = vcmp.eq.f32.partialorder %v103, %v142
    %vm315 = vcmp.eq.f32.partialorder %v104, %v145
    %vm316 = vcmp.eq.f32.partialorder %v105, %v148
    %vm317 = vcmp.eq.f32.partialorder %v106, %v151
    %vm318 = vcmp.eq.f32.partialorder %v107, %v154
    %vm319 = vcmp.eq.f32.partialorder %v108, %v157
    %vm320 = vcmp.eq.f32.partialorder %v109, %v160
    %vm321 = vcmp.eq.f32.partialorder %v110, %v163
    %vm322 = vcmp.eq.f32.partialorder %v111, %v166
    %vm323 = vcmp.eq.f32.partialorder %v112, %v169
    %vm324 = vcmp.eq.f32.partialorder %v113, %v172
    %vm325 = vcmp.eq.f32.partialorder %v114, %v175
    %vm326 = vcmp.eq.f32.partialorder %v115, %v178
    %vm327 = vcmp.eq.f32.partialorder %v116, %v181
    %v328 = vsel %vm312, %v311, 16
    %v329 = vsel %vm313, %v311, 16
    %v330 = vsel %vm314, %v311, 16
    %v331 = vsel %vm315, %v311, 16
    %v332 = vsel %vm316, %v311, 16
    %v333 = vsel %vm317, %v311, 16
    %v334 = vsel %vm318, %v311, 16
    %v335 = vsel %vm319, %v311, 16
    %v336 = vsel %vm320, %v311, 16
    %v337 = vsel %vm321, %v311, 16
    %v338 = vsel %vm322, %v311, 16
    %v339 = vsel %vm323, %v311, 16
    %v340 = vsel %vm324, %v311, 16
    %v341 = vsel %vm325, %v311, 16
    %v342 = vsel %vm326, %v311, 16
    %v343 = vsel %vm327, %v311, 16
    %v344 = vsel %vm133, %v328, 2147483647
    %v345 = vand.u32 %v344, 65535
    %v346 = vshra.s32 %v344, 16
    %v347 = vcvt.s32.f32 %v345
    %v348 = vcvt.s32.f32 %v346
    %349 = vmin.xlane.f32.xlu0 %v348
    %v350 = vpop.xlane.xlu0 %349
    %vm351 = vcmp.eq.f32.partialorder %v348, %v350
    %v352 = vsel %vm351, %v347, inf
    %353 = vmin.xlane.f32.xlu0 %v352
    %v354 = vpop.xlane.xlu0 %353
    %v355 = vcvt.f32.s32 %v354
    %v356 = vcvt.f32.s32 %v350
    %v357 = vshll.u32 %v356, 16
    %v358 = vadd.s32 %v357, %v355
    %v359 = vsel %vm133, %v329, 2147483647
    %v360 = vand.u32 %v359, 65535
    %v361 = vshra.s32 %v359, 16
    %v362 = vcvt.s32.f32 %v360
    %v363 = vcvt.s32.f32 %v361
    %364 = vmin.xlane.f32.xlu0 %v363
    %v365 = vpop.xlane.xlu0 %364
    %vm366 = vcmp.eq.f32.partialorder %v363, %v365
    %v367 = vsel %vm366, %v362, inf
    %368 = vmin.xlane.f32.xlu0 %v367
    %v369 = vpop.xlane.xlu0 %368
    %v370 = vcvt.f32.s32 %v369
    %v371 = vcvt.f32.s32 %v365
    %v372 = vshll.u32 %v371, 16
    %v373 = vadd.s32 %v372, %v370
    %v374 = vsel %vm133, %v330, 2147483647
    %v375 = vand.u32 %v374, 65535
    %v376 = vshra.s32 %v374, 16
    %v377 = vcvt.s32.f32 %v375
    %v378 = vcvt.s32.f32 %v376
    %379 = vmin.xlane.f32.xlu0 %v378
    %v380 = vpop.xlane.xlu0 %379
    %vm381 = vcmp.eq.f32.partialorder %v378, %v380
    %v382 = vsel %vm381, %v377, inf
    %383 = vmin.xlane.f32.xlu0 %v382
    %v384 = vpop.xlane.xlu0 %383
    %v385 = vcvt.f32.s32 %v384
    %v386 = vcvt.f32.s32 %v380
    %v387 = vshll.u32 %v386, 16
    %v388 = vadd.s32 %v387, %v385
    %v389 = vsel %vm133, %v331, 2147483647
    %v390 = vand.u32 %v389, 65535
    %v391 = vshra.s32 %v389, 16
    %v392 = vcvt.s32.f32 %v390
    %v393 = vcvt.s32.f32 %v391
    %394 = vmin.xlane.f32.xlu0 %v393
    %v395 = vpop.xlane.xlu0 %394
    %vm396 = vcmp.eq.f32.partialorder %v393, %v395
    %v397 = vsel %vm396, %v392, inf
    %398 = vmin.xlane.f32.xlu0 %v397
    %v399 = vpop.xlane.xlu0 %398
    %v400 = vcvt.f32.s32 %v399
    %v401 = vcvt.f32.s32 %v395
    %v402 = vshll.u32 %v401, 16
    %v403 = vadd.s32 %v402, %v400
    %v404 = vsel %vm133, %v332, 2147483647
    %v405 = vand.u32 %v404, 65535
    %v406 = vshra.s32 %v404, 16
    %v407 = vcvt.s32.f32 %v405
    %v408 = vcvt.s32.f32 %v406
    %409 = vmin.xlane.f32.xlu0 %v408
    %v410 = vpop.xlane.xlu0 %409
    %vm411 = vcmp.eq.f32.partialorder %v408, %v410
    %v412 = vsel %vm411, %v407, inf
    %413 = vmin.xlane.f32.xlu0 %v412
    %v414 = vpop.xlane.xlu0 %413
    %v415 = vcvt.f32.s32 %v414
    %v416 = vcvt.f32.s32 %v410
    %v417 = vshll.u32 %v416, 16
    %v418 = vadd.s32 %v417, %v415
    %v419 = vsel %vm133, %v333, 2147483647
    %v420 = vand.u32 %v419, 65535
    %v421 = vshra.s32 %v419, 16
    %v422 = vcvt.s32.f32 %v420
    %v423 = vcvt.s32.f32 %v421
    %424 = vmin.xlane.f32.xlu0 %v423
    %v425 = vpop.xlane.xlu0 %424
    %vm426 = vcmp.eq.f32.partialorder %v423, %v425
    %v427 = vsel %vm426, %v422, inf
    %428 = vmin.xlane.f32.xlu0 %v427
    %v429 = vpop.xlane.xlu0 %428
    %v430 = vcvt.f32.s32 %v429
    %v431 = vcvt.f32.s32 %v425
    %v432 = vshll.u32 %v431, 16
    %v433 = vadd.s32 %v432, %v430
    %v434 = vsel %vm133, %v334, 2147483647
    %v435 = vand.u32 %v434, 65535
    %v436 = vshra.s32 %v434, 16
    %v437 = vcvt.s32.f32 %v435
    %v438 = vcvt.s32.f32 %v436
    %439 = vmin.xlane.f32.xlu0 %v438
    %v440 = vpop.xlane.xlu0 %439
    %vm441 = vcmp.eq.f32.partialorder %v438, %v440
    %v442 = vsel %vm441, %v437, inf
    %443 = vmin.xlane.f32.xlu0 %v442
    %v444 = vpop.xlane.xlu0 %443
    %v445 = vcvt.f32.s32 %v444
    %v446 = vcvt.f32.s32 %v440
    %v447 = vshll.u32 %v446, 16
    %v448 = vadd.s32 %v447, %v445
    %v449 = vsel %vm133, %v335, 2147483647
    %v450 = vand.u32 %v449, 65535
    %v451 = vshra.s32 %v449, 16
    %v452 = vcvt.s32.f32 %v450
    %v453 = vcvt.s32.f32 %v451
    %454 = vmin.xlane.f32.xlu0 %v453
    %v455 = vpop.xlane.xlu0 %454
    %vm456 = vcmp.eq.f32.partialorder %v453, %v455
    %v457 = vsel %vm456, %v452, inf
    %458 = vmin.xlane.f32.xlu0 %v457
    %v459 = vpop.xlane.xlu0 %458
    %v460 = vcvt.f32.s32 %v459
    %v461 = vcvt.f32.s32 %v455
    %v462 = vshll.u32 %v461, 16
    %v463 = vadd.s32 %v462, %v460
    %v464 = vsel %vm133, %v336, 2147483647
    %v465 = vand.u32 %v464, 65535
    %v466 = vshra.s32 %v464, 16
    %v467 = vcvt.s32.f32 %v465
    %v468 = vcvt.s32.f32 %v466
    %469 = vmin.xlane.f32.xlu0 %v468
    %v470 = vpop.xlane.xlu0 %469
    %vm471 = vcmp.eq.f32.partialorder %v468, %v470
    %v472 = vsel %vm471, %v467, inf
    %473 = vmin.xlane.f32.xlu0 %v472
    %v474 = vpop.xlane.xlu0 %473
    %v475 = vcvt.f32.s32 %v474
    %v476 = vcvt.f32.s32 %v470
    %v477 = vshll.u32 %v476, 16
    %v478 = vadd.s32 %v477, %v475
    %v479 = vsel %vm133, %v337, 2147483647
    %v480 = vand.u32 %v479, 65535
    %v481 = vshra.s32 %v479, 16
    %v482 = vcvt.s32.f32 %v480
    %v483 = vcvt.s32.f32 %v481
    %484 = vmin.xlane.f32.xlu0 %v483
    %v485 = vpop.xlane.xlu0 %484
    %vm486 = vcmp.eq.f32.partialorder %v483, %v485
    %v487 = vsel %vm486, %v482, inf
    %488 = vmin.xlane.f32.xlu0 %v487
    %v489 = vpop.xlane.xlu0 %488
    %v490 = vcvt.f32.s32 %v489
    %v491 = vcvt.f32.s32 %v485
    %v492 = vshll.u32 %v491, 16
    %v493 = vadd.s32 %v492, %v490
    %v494 = vsel %vm133, %v338, 2147483647
    %v495 = vand.u32 %v494, 65535
    %v496 = vshra.s32 %v494, 16
    %v497 = vcvt.s32.f32 %v495
    %v498 = vcvt.s32.f32 %v496
    %499 = vmin.xlane.f32.xlu0 %v498
    %v500 = vpop.xlane.xlu0 %499
    %vm501 = vcmp.eq.f32.partialorder %v498, %v500
    %v502 = vsel %vm501, %v497, inf
    %503 = vmin.xlane.f32.xlu0 %v502
    %v504 = vpop.xlane.xlu0 %503
    %v505 = vcvt.f32.s32 %v504
    %v506 = vcvt.f32.s32 %v500
    %v507 = vshll.u32 %v506, 16
    %v508 = vadd.s32 %v507, %v505
    %v509 = vsel %vm133, %v339, 2147483647
    %v510 = vand.u32 %v509, 65535
    %v511 = vshra.s32 %v509, 16
    %v512 = vcvt.s32.f32 %v510
    %v513 = vcvt.s32.f32 %v511
    %514 = vmin.xlane.f32.xlu0 %v513
    %v515 = vpop.xlane.xlu0 %514
    %vm516 = vcmp.eq.f32.partialorder %v513, %v515
    %v517 = vsel %vm516, %v512, inf
    %518 = vmin.xlane.f32.xlu0 %v517
    %v519 = vpop.xlane.xlu0 %518
    %v520 = vcvt.f32.s32 %v519
    %v521 = vcvt.f32.s32 %v515
    %v522 = vshll.u32 %v521, 16
    %v523 = vadd.s32 %v522, %v520
    %v524 = vsel %vm133, %v340, 2147483647
    %v525 = vand.u32 %v524, 65535
    %v526 = vshra.s32 %v524, 16
    %v527 = vcvt.s32.f32 %v525
    %v528 = vcvt.s32.f32 %v526
    %529 = vmin.xlane.f32.xlu0 %v528
    %v530 = vpop.xlane.xlu0 %529
    %vm531 = vcmp.eq.f32.partialorder %v528, %v530
    %v532 = vsel %vm531, %v527, inf
    %533 = vmin.xlane.f32.xlu0 %v532
    %v534 = vpop.xlane.xlu0 %533
    %v535 = vcvt.f32.s32 %v534
    %v536 = vcvt.f32.s32 %v530
    %v537 = vshll.u32 %v536, 16
    %v538 = vadd.s32 %v537, %v535
    %v539 = vsel %vm133, %v341, 2147483647
    %v540 = vand.u32 %v539, 65535
    %v541 = vshra.s32 %v539, 16
    %v542 = vcvt.s32.f32 %v540
    %v543 = vcvt.s32.f32 %v541
    %544 = vmin.xlane.f32.xlu0 %v543
    %v545 = vpop.xlane.xlu0 %544
    %vm546 = vcmp.eq.f32.partialorder %v543, %v545
    %v547 = vsel %vm546, %v542, inf
    %548 = vmin.xlane.f32.xlu0 %v547
    %v549 = vpop.xlane.xlu0 %548
    %v550 = vcvt.f32.s32 %v549
    %v551 = vcvt.f32.s32 %v545
    %v552 = vshll.u32 %v551, 16
    %v553 = vadd.s32 %v552, %v550
    %v554 = vsel %vm133, %v342, 2147483647
    %v555 = vand.u32 %v554, 65535
    %v556 = vshra.s32 %v554, 16
    %v557 = vcvt.s32.f32 %v555
    %v558 = vcvt.s32.f32 %v556
    %559 = vmin.xlane.f32.xlu0 %v558
    %v560 = vpop.xlane.xlu0 %559
    %vm561 = vcmp.eq.f32.partialorder %v558, %v560
    %v562 = vsel %vm561, %v557, inf
    %563 = vmin.xlane.f32.xlu0 %v562
    %v564 = vpop.xlane.xlu0 %563
    %v565 = vcvt.f32.s32 %v564
    %v566 = vcvt.f32.s32 %v560
    %v567 = vshll.u32 %v566, 16
    %v568 = vadd.s32 %v567, %v565
    %v569 = vsel %vm133, %v343, 2147483647
    %v570 = vand.u32 %v569, 65535
    %v571 = vshra.s32 %v569, 16
    %v572 = vcvt.s32.f32 %v570
    %v573 = vcvt.s32.f32 %v571
    %574 = vmin.xlane.f32.xlu0 %v573
    %v575 = vpop.xlane.xlu0 %574
    %vm576 = vcmp.eq.f32.partialorder %v573, %v575
    %v577 = vsel %vm576, %v572, inf
    %578 = vmin.xlane.f32.xlu0 %v577
    %v579 = vpop.xlane.xlu0 %578
    %v580 = vcvt.f32.s32 %v579
    %v581 = vcvt.f32.s32 %v575
    %v582 = vshll.u32 %v581, 16
    %v583 = vadd.s32 %v582, %v580
    %s584 = sadd.s32 0, 0
    %s585 = smul.u32 %s584, 128
    %v586 = vlaneseq
    %v587 = vshrl.u32 %v586, 7
    %v588 = vadd.s32 %v587, 8
    %v589 = vadd.s32 %v587, 16
    %v590 = vadd.s32 %v587, 24
    %v591 = vadd.s32 %v587, 32
    %v592 = vadd.s32 %v587, 40
    %v593 = vadd.s32 %v587, 48
    %v594 = vadd.s32 %v587, 56
    %v595 = vadd.s32 %v587, 64
    %v596 = vadd.s32 %v587, 72
    %v597 = vadd.s32 %v587, 80
    %v598 = vadd.s32 %v587, 88
    %v599 = vadd.s32 %v587, 96
    %v600 = vadd.s32 %v587, 104
    %v601 = vadd.s32 %v587, 112
    %v602 = vadd.s32 %v587, 120
    %v603 = vstv %s585
    %v604 = vadd.s32 %v603, %v587
    %v605 = vadd.s32 %v603, %v588
    %v606 = vadd.s32 %v603, %v589
    %v607 = vadd.s32 %v603, %v590
    %v608 = vadd.s32 %v603, %v591
    %v609 = vadd.s32 %v603, %v592
    %v610 = vadd.s32 %v603, %v593
    %v611 = vadd.s32 %v603, %v594
    %v612 = vadd.s32 %v603, %v595
    %v613 = vadd.s32 %v603, %v596
    %v614 = vadd.s32 %v603, %v597
    %v615 = vadd.s32 %v603, %v598
    %v616 = vadd.s32 %v603, %v599
    %v617 = vadd.s32 %v603, %v600
    %v618 = vadd.s32 %v603, %v601
    %v619 = vadd.s32 %v603, %v602
    %vm620 = vcmp.lt.s32.totalorder %v604, 50
    %vm621 = vcmp.lt.s32.totalorder %v605, 50
    %vm622 = vcmp.lt.s32.totalorder %v606, 50
    %vm623 = vcmp.lt.s32.totalorder %v607, 50
    %vm624 = vcmp.lt.s32.totalorder %v608, 50
    %vm625 = vcmp.lt.s32.totalorder %v609, 50
    %vm626 = vcmp.lt.s32.totalorder %v610, 50
    %vm627 = vcmp.lt.s32.totalorder %v611, 50
    %vm628 = vcmp.lt.s32.totalorder %v612, 50
    %vm629 = vcmp.lt.s32.totalorder %v613, 50
    %vm630 = vcmp.lt.s32.totalorder %v614, 50
    %vm631 = vcmp.lt.s32.totalorder %v615, 50
    %vm632 = vcmp.lt.s32.totalorder %v616, 50
    %vm633 = vcmp.lt.s32.totalorder %v617, 50
    %vm634 = vcmp.lt.s32.totalorder %v618, 50
    %vm635 = vcmp.lt.s32.totalorder %v619, 50
    %v636 = vsel %vm620, %v279, 0.0
    %v637 = vsel %vm621, %v281, 0.0
    %v638 = vsel %vm622, %v283, 0.0
    %v639 = vsel %vm623, %v285, 0.0
    %v640 = vsel %vm624, %v287, 0.0
    %v641 = vsel %vm625, %v289, 0.0
    %v642 = vsel %vm626, %v291, 0.0
    %v643 = vsel %vm627, %v293, 0.0
    %v644 = vsel %vm628, %v295, 0.0
    %v645 = vsel %vm629, %v297, 0.0
    %v646 = vsel %vm630, %v299, 0.0
    %v647 = vsel %vm631, %v301, 0.0
    %v648 = vsel %vm632, %v303, 0.0
    %v649 = vsel %vm633, %v305, 0.0
    %v650 = vsel %vm634, %v307, 0.0
    %v651 = vsel %vm635, %v309, 0.0
    %vm652 = vcmp.eq.s32.totalorder %v358, %v117
    %vm653 = vcmp.eq.s32.totalorder %v373, %v118
    %vm654 = vcmp.eq.s32.totalorder %v388, %v119
    %vm655 = vcmp.eq.s32.totalorder %v403, %v120
    %vm656 = vcmp.eq.s32.totalorder %v418, %v121
    %vm657 = vcmp.eq.s32.totalorder %v433, %v122
    %vm658 = vcmp.eq.s32.totalorder %v448, %v123
    %vm659 = vcmp.eq.s32.totalorder %v463, %v124
    %vm660 = vcmp.eq.s32.totalorder %v478, %v125
    %vm661 = vcmp.eq.s32.totalorder %v493, %v126
    %vm662 = vcmp.eq.s32.totalorder %v508, %v127
    %vm663 = vcmp.eq.s32.totalorder %v523, %v128
    %vm664 = vcmp.eq.s32.totalorder %v538, %v129
    %vm665 = vcmp.eq.s32.totalorder %v553, %v130
    %vm666 = vcmp.eq.s32.totalorder %v568, %v131
    %vm667 = vcmp.eq.s32.totalorder %v583, %v132
    %vm668 = vmand %vm620, %vm652
    %vm669 = vmand %vm621, %vm653
    %vm670 = vmand %vm622, %vm654
    %vm671 = vmand %vm623, %vm655
    %vm672 = vmand %vm624, %vm656
    %vm673 = vmand %vm625, %vm657
    %vm674 = vmand %vm626, %vm658
    %vm675 = vmand %vm627, %vm659
    %vm676 = vmand %vm628, %vm660
    %vm677 = vmand %vm629, %vm661
    %vm678 = vmand %vm630, %vm662
    %vm679 = vmand %vm631, %vm663
    %vm680 = vmand %vm632, %vm664
    %vm681 = vmand %vm633, %vm665
    %vm682 = vmand %vm634, %vm666
    %vm683 = vmand %vm635, %vm667
    %v684 = vsel %vm668, 1.0, 0.0
    %v685 = vsel %vm669, 1.0, 0.0
    %v686 = vsel %vm670, 1.0, 0.0
    %v687 = vsel %vm671, 1.0, 0.0
    %v688 = vsel %vm672, 1.0, 0.0
    %v689 = vsel %vm673, 1.0, 0.0
    %v690 = vsel %vm674, 1.0, 0.0
    %v691 = vsel %vm675, 1.0, 0.0
    %v692 = vsel %vm676, 1.0, 0.0
    %v693 = vsel %vm677, 1.0, 0.0
    %v694 = vsel %vm678, 1.0, 0.0
    %v695 = vsel %vm679, 1.0, 0.0
    %v696 = vsel %vm680, 1.0, 0.0
    %v697 = vsel %vm681, 1.0, 0.0
    %v698 = vsel %vm682, 1.0, 0.0
    %v699 = vsel %vm683, 1.0, 0.0
    %v700 = vmul.f32 %v636, 15.0
    %v701 = vmul.f32 %v637, 15.0
    %v702 = vmul.f32 %v638, 15.0
    %v703 = vmul.f32 %v639, 15.0
    %v704 = vmul.f32 %v640, 15.0
    %v705 = vmul.f32 %v641, 15.0
    %v706 = vmul.f32 %v642, 15.0
    %v707 = vmul.f32 %v643, 15.0
    %v708 = vmul.f32 %v644, 15.0
    %v709 = vmul.f32 %v645, 15.0
    %v710 = vmul.f32 %v646, 15.0
    %v711 = vmul.f32 %v647, 15.0
    %v712 = vmul.f32 %v648, 15.0
    %v713 = vmul.f32 %v649, 15.0
    %v714 = vmul.f32 %v650, 15.0
    %v715 = vmul.f32 %v651, 15.0
    %v716 = vceil.f32 %v700
    %v717 = vceil.f32 %v701
    %v718 = vceil.f32 %v702
    %v719 = vceil.f32 %v703
    %v720 = vceil.f32 %v704
    %v721 = vceil.f32 %v705
    %v722 = vceil.f32 %v706
    %v723 = vceil.f32 %v707
    %v724 = vceil.f32 %v708
    %v725 = vceil.f32 %v709
    %v726 = vceil.f32 %v710
    %v727 = vceil.f32 %v711
    %v728 = vceil.f32 %v712
    %v729 = vceil.f32 %v713
    %v730 = vceil.f32 %v714
    %v731 = vceil.f32 %v715
    %v732 = vcvt.f32.s32.to.zero.pseudo %v716
    %v733 = vcvt.f32.s32.to.zero.pseudo %v717
    %v734 = vcvt.f32.s32.to.zero.pseudo %v718
    %v735 = vcvt.f32.s32.to.zero.pseudo %v719
    %v736 = vcvt.f32.s32.to.zero.pseudo %v720
    %v737 = vcvt.f32.s32.to.zero.pseudo %v721
    %v738 = vcvt.f32.s32.to.zero.pseudo %v722
    %v739 = vcvt.f32.s32.to.zero.pseudo %v723
    %v740 = vcvt.f32.s32.to.zero.pseudo %v724
    %v741 = vcvt.f32.s32.to.zero.pseudo %v725
    %v742 = vcvt.f32.s32.to.zero.pseudo %v726
    %v743 = vcvt.f32.s32.to.zero.pseudo %v727
    %v744 = vcvt.f32.s32.to.zero.pseudo %v728
    %v745 = vcvt.f32.s32.to.zero.pseudo %v729
    %v746 = vcvt.f32.s32.to.zero.pseudo %v730
    %v747 = vcvt.f32.s32.to.zero.pseudo %v731
    %v748 = vsub.s32 %v732, 1
    %v749 = vsub.s32 %v733, 1
    %v750 = vsub.s32 %v734, 1
    %v751 = vsub.s32 %v735, 1
    %v752 = vsub.s32 %v736, 1
    %v753 = vsub.s32 %v737, 1
    %v754 = vsub.s32 %v738, 1
    %v755 = vsub.s32 %v739, 1
    %v756 = vsub.s32 %v740, 1
    %v757 = vsub.s32 %v741, 1
    %v758 = vsub.s32 %v742, 1
    %v759 = vsub.s32 %v743, 1
    %v760 = vsub.s32 %v744, 1
    %v761 = vsub.s32 %v745, 1
    %v762 = vsub.s32 %v746, 1
    %v763 = vsub.s32 %v747, 1
    %vm764 = vcmp.gt.s32.totalorder %v748, 0
    %v765 = vsel %vm764, %v748, 0
    %vm766 = vcmp.gt.s32.totalorder %v749, 0
    %v767 = vsel %vm766, %v749, 0
    %vm768 = vcmp.gt.s32.totalorder %v750, 0
    %v769 = vsel %vm768, %v750, 0
    %vm770 = vcmp.gt.s32.totalorder %v751, 0
    %v771 = vsel %vm770, %v751, 0
    %vm772 = vcmp.gt.s32.totalorder %v752, 0
    %v773 = vsel %vm772, %v752, 0
    %vm774 = vcmp.gt.s32.totalorder %v753, 0
    %v775 = vsel %vm774, %v753, 0
    %vm776 = vcmp.gt.s32.totalorder %v754, 0
    %v777 = vsel %vm776, %v754, 0
    %vm778 = vcmp.gt.s32.totalorder %v755, 0
    %v779 = vsel %vm778, %v755, 0
    %vm780 = vcmp.gt.s32.totalorder %v756, 0
    %v781 = vsel %vm780, %v756, 0
    %vm782 = vcmp.gt.s32.totalorder %v757, 0
    %v783 = vsel %vm782, %v757, 0
    %vm784 = vcmp.gt.s32.totalorder %v758, 0
    %v785 = vsel %vm784, %v758, 0
    %vm786 = vcmp.gt.s32.totalorder %v759, 0
    %v787 = vsel %vm786, %v759, 0
    %vm788 = vcmp.gt.s32.totalorder %v760, 0
    %v789 = vsel %vm788, %v760, 0
    %vm790 = vcmp.gt.s32.totalorder %v761, 0
    %v791 = vsel %vm790, %v761, 0
    %vm792 = vcmp.gt.s32.totalorder %v762, 0
    %v793 = vsel %vm792, %v762, 0
    %vm794 = vcmp.gt.s32.totalorder %v763, 0
    %v795 = vsel %vm794, %v763, 0
    %vm796 = vcmp.lt.s32.totalorder %v765, 14
    %v797 = vsel %vm796, %v765, 14
    %vm798 = vcmp.lt.s32.totalorder %v767, 14
    %v799 = vsel %vm798, %v767, 14
    %vm800 = vcmp.lt.s32.totalorder %v769, 14
    %v801 = vsel %vm800, %v769, 14
    %vm802 = vcmp.lt.s32.totalorder %v771, 14
    %v803 = vsel %vm802, %v771, 14
    %vm804 = vcmp.lt.s32.totalorder %v773, 14
    %v805 = vsel %vm804, %v773, 14
    %vm806 = vcmp.lt.s32.totalorder %v775, 14
    %v807 = vsel %vm806, %v775, 14
    %vm808 = vcmp.lt.s32.totalorder %v777, 14
    %v809 = vsel %vm808, %v777, 14
    %vm810 = vcmp.lt.s32.totalorder %v779, 14
    %v811 = vsel %vm810, %v779, 14
    %vm812 = vcmp.lt.s32.totalorder %v781, 14
    %v813 = vsel %vm812, %v781, 14
    %vm814 = vcmp.lt.s32.totalorder %v783, 14
    %v815 = vsel %vm814, %v783, 14
    %vm816 = vcmp.lt.s32.totalorder %v785, 14
    %v817 = vsel %vm816, %v785, 14
    %vm818 = vcmp.lt.s32.totalorder %v787, 14
    %v819 = vsel %vm818, %v787, 14
    %vm820 = vcmp.lt.s32.totalorder %v789, 14
    %v821 = vsel %vm820, %v789, 14
    %vm822 = vcmp.lt.s32.totalorder %v791, 14
    %v823 = vsel %vm822, %v791, 14
    %vm824 = vcmp.lt.s32.totalorder %v793, 14
    %v825 = vsel %vm824, %v793, 14
    %vm826 = vcmp.lt.s32.totalorder %v795, 14
    %v827 = vsel %vm826, %v795, 14
    %vm828 = vcmp.eq.s32.totalorder %v797, %v311
    %vm829 = vcmp.eq.s32.totalorder %v799, %v311
    %vm830 = vcmp.eq.s32.totalorder %v801, %v311
    %vm831 = vcmp.eq.s32.totalorder %v803, %v311
    %vm832 = vcmp.eq.s32.totalorder %v805, %v311
    %vm833 = vcmp.eq.s32.totalorder %v807, %v311
    %vm834 = vcmp.eq.s32.totalorder %v809, %v311
    %vm835 = vcmp.eq.s32.totalorder %v811, %v311
    %vm836 = vcmp.eq.s32.totalorder %v813, %v311
    %vm837 = vcmp.eq.s32.totalorder %v815, %v311
    %vm838 = vcmp.eq.s32.totalorder %v817, %v311
    %vm839 = vcmp.eq.s32.totalorder %v819, %v311
    %vm840 = vcmp.eq.s32.totalorder %v821, %v311
    %vm841 = vcmp.eq.s32.totalorder %v823, %v311
    %vm842 = vcmp.eq.s32.totalorder %v825, %v311
    %vm843 = vcmp.eq.s32.totalorder %v827, %v311
    %v844 = vsel %vm620, 1, 0
    %v845 = vsel %vm621, 1, 0
    %v846 = vsel %vm622, 1, 0
    %v847 = vsel %vm623, 1, 0
    %v848 = vsel %vm624, 1, 0
    %v849 = vsel %vm625, 1, 0
    %v850 = vsel %vm626, 1, 0
    %v851 = vsel %vm627, 1, 0
    %v852 = vsel %vm628, 1, 0
    %v853 = vsel %vm629, 1, 0
    %v854 = vsel %vm630, 1, 0
    %v855 = vsel %vm631, 1, 0
    %v856 = vsel %vm632, 1, 0
    %v857 = vsel %vm633, 1, 0
    %v858 = vsel %vm634, 1, 0
    %v859 = vsel %vm635, 1, 0
    %vm860 = vcmp.eq.s32.totalorder %v844, 1
    %vm861 = vcmp.eq.s32.totalorder %v845, 1
    %vm862 = vcmp.eq.s32.totalorder %v846, 1
    %vm863 = vcmp.eq.s32.totalorder %v847, 1
    %vm864 = vcmp.eq.s32.totalorder %v848, 1
    %vm865 = vcmp.eq.s32.totalorder %v849, 1
    %vm866 = vcmp.eq.s32.totalorder %v850, 1
    %vm867 = vcmp.eq.s32.totalorder %v851, 1
    %vm868 = vcmp.eq.s32.totalorder %v852, 1
    %vm869 = vcmp.eq.s32.totalorder %v853, 1
    %vm870 = vcmp.eq.s32.totalorder %v854, 1
    %vm871 = vcmp.eq.s32.totalorder %v855, 1
    %vm872 = vcmp.eq.s32.totalorder %v856, 1
    %vm873 = vcmp.eq.s32.totalorder %v857, 1
    %vm874 = vcmp.eq.s32.totalorder %v858, 1
    %vm875 = vcmp.eq.s32.totalorder %v859, 1
    %vm876 = vmand %vm828, %vm860
    %vm877 = vmand %vm829, %vm861
    %vm878 = vmand %vm830, %vm862
    %vm879 = vmand %vm831, %vm863
    %vm880 = vmand %vm832, %vm864
    %vm881 = vmand %vm833, %vm865
    %vm882 = vmand %vm834, %vm866
    %vm883 = vmand %vm835, %vm867
    %vm884 = vmand %vm836, %vm868
    %vm885 = vmand %vm837, %vm869
    %vm886 = vmand %vm838, %vm870
    %vm887 = vmand %vm839, %vm871
    %vm888 = vmand %vm840, %vm872
    %vm889 = vmand %vm841, %vm873
    %vm890 = vmand %vm842, %vm874
    %vm891 = vmand %vm843, %vm875
    %v892 = vsel %vm876, 1.0, 0.0
    %v893 = vsel %vm877, 1.0, 0.0
    %v894 = vsel %vm878, 1.0, 0.0
    %v895 = vsel %vm879, 1.0, 0.0
    %v896 = vsel %vm880, 1.0, 0.0
    %v897 = vsel %vm881, 1.0, 0.0
    %v898 = vsel %vm882, 1.0, 0.0
    %v899 = vsel %vm883, 1.0, 0.0
    %v900 = vsel %vm884, 1.0, 0.0
    %v901 = vsel %vm885, 1.0, 0.0
    %v902 = vsel %vm886, 1.0, 0.0
    %v903 = vsel %vm887, 1.0, 0.0
    %v904 = vsel %vm888, 1.0, 0.0
    %v905 = vsel %vm889, 1.0, 0.0
    %v906 = vsel %vm890, 1.0, 0.0
    %v907 = vsel %vm891, 1.0, 0.0
    %vm908 = vcmp.eq.s32.totalorder %v311, 0
    %vm909 = vcmp.eq.s32.totalorder %v311, 1
    %vm910 = vcmp.eq.s32.totalorder %v311, 2
    %912 = vset.pattern.permute.xlu0 0
    %913 = vperm.xlu0 %912, %v684
    %v914 = vpop.permute.xlu0 %913
    %917 = vset.pattern.permute.xlu0 0
    %918 = vperm.xlu0 %917, %v685
    %v919 = vpop.permute.xlu0 %918
    %922 = vset.pattern.permute.xlu0 0
    %923 = vperm.xlu0 %922, %v686
    %v924 = vpop.permute.xlu0 %923
    %927 = vset.pattern.permute.xlu0 0
    %928 = vperm.xlu0 %927, %v687
    %v929 = vpop.permute.xlu0 %928
    %932 = vset.pattern.permute.xlu0 0
    %933 = vperm.xlu0 %932, %v688
    %v934 = vpop.permute.xlu0 %933
    %937 = vset.pattern.permute.xlu0 0
    %938 = vperm.xlu0 %937, %v689
    %v939 = vpop.permute.xlu0 %938
    %942 = vset.pattern.permute.xlu0 0
    %943 = vperm.xlu0 %942, %v690
    %v944 = vpop.permute.xlu0 %943
    %947 = vset.pattern.permute.xlu0 0
    %948 = vperm.xlu0 %947, %v691
    %v949 = vpop.permute.xlu0 %948
    %952 = vset.pattern.permute.xlu0 0
    %953 = vperm.xlu0 %952, %v692
    %v954 = vpop.permute.xlu0 %953
    %957 = vset.pattern.permute.xlu0 0
    %958 = vperm.xlu0 %957, %v693
    %v959 = vpop.permute.xlu0 %958
    %962 = vset.pattern.permute.xlu0 0
    %963 = vperm.xlu0 %962, %v694
    %v964 = vpop.permute.xlu0 %963
    %967 = vset.pattern.permute.xlu0 0
    %968 = vperm.xlu0 %967, %v695
    %v969 = vpop.permute.xlu0 %968
    %972 = vset.pattern.permute.xlu0 0
    %973 = vperm.xlu0 %972, %v696
    %v974 = vpop.permute.xlu0 %973
    %977 = vset.pattern.permute.xlu0 0
    %978 = vperm.xlu0 %977, %v697
    %v979 = vpop.permute.xlu0 %978
    %982 = vset.pattern.permute.xlu0 0
    %983 = vperm.xlu0 %982, %v698
    %v984 = vpop.permute.xlu0 %983
    %987 = vset.pattern.permute.xlu0 0
    %988 = vperm.xlu0 %987, %v699
    %v989 = vpop.permute.xlu0 %988
    %v991 = vsel %vm910, %v914, 0.0
    %v992 = vsel %vm910, %v919, 0.0
    %v993 = vsel %vm910, %v924, 0.0
    %v994 = vsel %vm910, %v929, 0.0
    %v995 = vsel %vm910, %v934, 0.0
    %v996 = vsel %vm910, %v939, 0.0
    %v997 = vsel %vm910, %v944, 0.0
    %v998 = vsel %vm910, %v949, 0.0
    %v999 = vsel %vm910, %v954, 0.0
    %v1000 = vsel %vm910, %v959, 0.0
    %v1001 = vsel %vm910, %v964, 0.0
    %v1002 = vsel %vm910, %v969, 0.0
    %v1003 = vsel %vm910, %v974, 0.0
    %v1004 = vsel %vm910, %v979, 0.0
    %v1005 = vsel %vm910, %v984, 0.0
    %v1006 = vsel %vm910, %v989, 0.0
    %v1007 = vsel %vm909, %v636, %v991
    %v1008 = vsel %vm909, %v637, %v992
    %v1009 = vsel %vm909, %v638, %v993
    %v1010 = vsel %vm909, %v639, %v994
    %v1011 = vsel %vm909, %v640, %v995
    %v1012 = vsel %vm909, %v641, %v996
    %v1013 = vsel %vm909, %v642, %v997
    %v1014 = vsel %vm909, %v643, %v998
    %v1015 = vsel %vm909, %v644, %v999
    %v1016 = vsel %vm909, %v645, %v1000
    %v1017 = vsel %vm909, %v646, %v1001
    %v1018 = vsel %vm909, %v647, %v1002
    %v1019 = vsel %vm909, %v648, %v1003
    %v1020 = vsel %vm909, %v649, %v1004
    %v1021 = vsel %vm909, %v650, %v1005
    %v1022 = vsel %vm909, %v651, %v1006
    %v1023 = vsel %vm908, 1.0, %v1007
    %v1024 = vsel %vm908, 1.0, %v1008
    %v1025 = vsel %vm908, 1.0, %v1009
    %v1026 = vsel %vm908, 1.0, %v1010
    %v1027 = vsel %vm908, 1.0, %v1011
    %v1028 = vsel %vm908, 1.0, %v1012
    %v1029 = vsel %vm908, 1.0, %v1013
    %v1030 = vsel %vm908, 1.0, %v1014
    %v1031 = vsel %vm908, 1.0, %v1015
    %v1032 = vsel %vm908, 1.0, %v1016
    %v1033 = vsel %vm908, 1.0, %v1017
    %v1034 = vsel %vm908, 1.0, %v1018
    %v1035 = vsel %vm908, 1.0, %v1019
    %v1036 = vsel %vm908, 1.0, %v1020
    %v1037 = vsel %vm908, 1.0, %v1021
    %v1038 = vsel %vm908, 1.0, %v1022
    %v1039 = vld [vmem:[#allocation2] sm:$0xff]
    %1040 = vxpose.xlu0.b32.start [1/16] %v1023, 128
    %1041 = vxpose.xlu0.b32.cont [2/16] %v1024, 128
    %1042 = vxpose.xlu0.b32.cont [3/16] %v1025, 128
    %1043 = vxpose.xlu0.b32.cont [4/16] %v1026, 128
    %1044 = vxpose.xlu0.b32.cont [5/16] %v1027, 128
    %1045 = vxpose.xlu0.b32.cont [6/16] %v1028, 128
    %1046 = vxpose.xlu0.b32.cont [7/16] %v1029, 128
    %1047 = vxpose.xlu0.b32.cont [8/16] %v1030, 128
    %1048 = vxpose.xlu0.b32.cont [9/16] %v1031, 128
    %1049 = vxpose.xlu0.b32.cont [10/16] %v1032, 128
    %1050 = vxpose.xlu0.b32.cont [11/16] %v1033, 128
    %1051 = vxpose.xlu0.b32.cont [12/16] %v1034, 128
    %1052 = vxpose.xlu0.b32.cont [13/16] %v1035, 128
    %1053 = vxpose.xlu0.b32.cont [14/16] %v1036, 128
    %1054 = vxpose.xlu0.b32.cont [15/16] %v1037, 128
    %1055 = vxpose.xlu0.b32.end [16/16] %v1038, 128
    %v1056 = vpop.trf.xlu0
    %v1057 = vpop.trf.xlu0
    %v1058 = vpop.trf.xlu0
    %v1059 = vpop.trf.xlu0
    %v1060 = vpop.trf.xlu0
    %v1061 = vpop.trf.xlu0
    %v1062 = vpop.trf.xlu0
    %v1063 = vpop.trf.xlu0
    %v1064 = vpop.trf.xlu0
    %v1065 = vpop.trf.xlu0
    %v1066 = vpop.trf.xlu0
    %v1067 = vpop.trf.xlu0
    %v1068 = vpop.trf.xlu0
    %v1069 = vpop.trf.xlu0
    %v1070 = vpop.trf.xlu0
    %v1071 = vpop.trf.xlu0
    %1072 = vmatprep.subr.mxu0 0.0
    %1073 = vmatpush1.msra.mxu0 %v907
    %1074 = vmatprep.subr.mxu0 0.0
    %1075 = vmatpush1.msra.mxu0 %v906
    %1076 = vmatprep.subr.mxu0 0.0
    %1077 = vmatpush1.msra.mxu0 %v905
    %1078 = vmatprep.subr.mxu0 0.0
    %1079 = vmatpush1.msra.mxu0 %v904
    %1080 = vmatprep.subr.mxu0 0.0
    %1081 = vmatpush1.msra.mxu0 %v903
    %1082 = vmatprep.subr.mxu0 0.0
    %1083 = vmatpush1.msra.mxu0 %v902
    %1084 = vmatprep.subr.mxu0 0.0
    %1085 = vmatpush1.msra.mxu0 %v901
    %1086 = vmatprep.subr.mxu0 0.0
    %1087 = vmatpush1.msra.mxu0 %v900
    %1088 = vmatprep.subr.mxu0 0.0
    %1089 = vmatpush1.msra.mxu0 %v899
    %1090 = vmatprep.subr.mxu0 0.0
    %1091 = vmatpush1.msra.mxu0 %v898
    %1092 = vmatprep.subr.mxu0 0.0
    %1093 = vmatpush1.msra.mxu0 %v897
    %1094 = vmatprep.subr.mxu0 0.0
    %1095 = vmatpush1.msra.mxu0 %v896
    %1096 = vmatprep.subr.mxu0 0.0
    %1097 = vmatpush1.msra.mxu0 %v895
    %1098 = vmatprep.subr.mxu0 0.0
    %1099 = vmatpush1.msra.mxu0 %v894
    %1100 = vmatprep.subr.mxu0 0.0
    %1101 = vmatpush1.msra.mxu0 %v893
    %1102 = vmatprep.subr.mxu0 0.0
    %1103 = vmatpush1.msra.mxu0 %v892
    %1104 = vmatprep.subr.mxu0 0.0
    %1105 = vmatpush2.msra.mxu0 0.0
    %1106 = vmatprep.subr.mxu0 0.0
    %1107 = vmatpush2.msra.mxu0 0.0
    %1108 = vmatprep.subr.mxu0 0.0
    %1109 = vmatpush2.msra.mxu0 0.0
    %1110 = vmatprep.subr.mxu0 0.0
    %1111 = vmatpush2.msra.mxu0 0.0
    %1112 = vmatprep.subr.mxu0 0.0
    %1113 = vmatpush2.msra.mxu0 0.0
    %1114 = vmatprep.subr.mxu0 0.0
    %1115 = vmatpush2.msra.mxu0 0.0
    %1116 = vmatprep.subr.mxu0 0.0
    %1117 = vmatpush2.msra.mxu0 0.0
    %1118 = vmatprep.subr.mxu0 0.0
    %1119 = vmatpush2.msra.mxu0 0.0
    %1120 = vmatprep.subr.mxu0 0.0
    %1121 = vmatpush2.msra.mxu0 0.0
    %1122 = vmatprep.subr.mxu0 0.0
    %1123 = vmatpush2.msra.mxu0 0.0
    %1124 = vmatprep.subr.mxu0 0.0
    %1125 = vmatpush2.msra.mxu0 0.0
    %1126 = vmatprep.subr.mxu0 0.0
    %1127 = vmatpush2.msra.mxu0 0.0
    %1128 = vmatprep.subr.mxu0 0.0
    %1129 = vmatpush2.msra.mxu0 0.0
    %1130 = vmatprep.subr.mxu0 0.0
    %1131 = vmatpush2.msra.mxu0 0.0
    %1132 = vmatprep.subr.mxu0 0.0
    %1133 = vmatpush2.msra.mxu0 0.0
    %1134 = vmatprep.subr.mxu0 0.0
    %1135 = vmatpush2.msra.mxu0 0.0
    %1136 = vmatprep.mubr.f32.mxu0 0.0
    %1137 = vmatmul.mubr.f32.gmra.mxu0 %v1056
    %v1138 = vpop.f32.mrf.mxu0
    %v1139 = vadd.f32 0.0, %v1138
    %v1140 = vpop.f32.mrf.mxu0
    %1141 = vdwg.mxu0
    %v1142 = vadd.f32 %v1039, %v1139
    %1143 = vst [vmem:[#allocation2] sm:$0xff] %v1142
    // Predicated region
    $region14: #{tpu_custom_call.1} parent=1 // pred_check
      _
    $region15: #{tpu_custom_call.1} parent=1 // pred_check_branch
      %1145 = sbr.rel (0) target = $region17
    $region16: #{tpu_custom_call.1} parent=1 // pred_region
      %s1147 = ssub.s32 128, 128
      %1148 = vsyncadd [#allocation3], %s1147
      %s1150 = sshll.u32 [#allocation2], 4
      %s1151 = int_to_ptr.vmem [resolvable:$true] %s1150
      %1153 = dma.vmem_to_hbm [thread:$0]  %s1151, 128, %s2, [#allocation3]
    $region17: #{tpu_custom_call.1} parent=1 // pred_fallthru
      _
    // Predicated region
    $region18: #{tpu_custom_call.1} parent=1 // pred_check
      _
    $region19: #{tpu_custom_call.1} parent=1 // pred_check_branch
      %1155 = sbr.rel (0) target = $region21
    $region20: #{tpu_custom_call.1} parent=1 // pred_region
      %1156 = dma.done [#allocation3], 128
    $region21: #{tpu_custom_call.1} parent=1 // pred_fallthru
      _
    %1157 = vsyncpa [#allocation3], 1

</llo_original>
